<compile_context>
chip_gen: v6e
topology: v6e:2x2x1
jax: 0.10.0
libtpu: 0.0.40
codegen_flags: <defaults>
</compile_context>

<pallas_src>
import jax
import jax.numpy as jnp
from jax.experimental import pallas as pl
from jax.experimental.pallas import tpu as pltpu


def _make_kernel(d):
    """Unrolled, Horner-factored VPU quadratic-form kernel for feature dim d."""
    pairs = [(j, k) for j in range(d) for k in range(j, d)]
    n_pairs = len(pairs)
    idx = {p: i for i, p in enumerate(pairs)}   # flat upper-triangular index

    def kernel(coef_ref, xs_ref, o_ref):
        # xs_ref: (D, TM, TL) f32 lane-dense slab; o_ref: (TM, TL) f32.
        xs = [xs_ref[j] for j in range(d)]       # each (TM, TL): whole vregs, no slicing
        acc = None
        # Horner-factored quadratic form: sum_j x_j * (sum_{k>=j} coef_jk * x_k)
        for j in range(d):
            inner = coef_ref[idx[(j, j)]] * xs[j]
            for k in range(j + 1, d):
                inner = inner + coef_ref[idx[(j, k)]] * xs[k]
            term = xs[j] * inner
            acc = term if acc is None else acc + term
        # '+ c': single scalar-broadcast add (c is the last SMEM coefficient).
        o_ref[...] = acc + coef_ref[n_pairs]

    return kernel


def _choose_tiles(n):
    """Pick (TM, TL): TM multiple of 8 (sublanes), TL multiple of 128 (lanes).

    Targets ~2.5 MiB of f32 input per grid step at large N while keeping at
    least 2 grid steps when there is enough work (v7x has 2 TensorCores), and
    shrinks down to a single (8, 128) tile for tiny batches.
    """
    tm, tl = 128, 1024
    while tm > 8 and n <= tm * tl:
        tm //= 2
    while tl > 128 and n <= tm * tl:
        tl //= 2
    return tm, tl


def lognorm_gauss(X, W, c, *, min_pallas_n=4096, force_pallas=False):
    """X: (N, D) f32, W: (D, D) f32, c: scalar -> (N,) == diag(-0.5 X W X^T + c)."""
    N, D = X.shape
    X = X.astype(jnp.float32)
    W = W.astype(jnp.float32)
    c = jnp.asarray(c, jnp.float32).reshape(())

    # Fold -0.5 and the symmetrization of W into flat upper-triangular coefs.
    M = -0.5 * W
    S = M + M.T - jnp.diag(jnp.diag(M))   # offdiag: -0.5*(W_jk+W_kj); diag: -0.5*W_jj
    pairs = [(j, k) for j in range(D) for k in range(j, D)]
    coef = jnp.stack([S[j, k] for (j, k) in pairs] + [c])      # (n_pairs + 1,)

    if N < min_pallas_n and not force_pallas:
        # Small-N fast path: dispatch/DMA setup dominates; let XLA fuse it.
        return -0.5 * jnp.einsum("nj,jk,nk->n", X, W, X) + c

    tm, tl = _choose_tiles(N)
    n_blocks = pl.cdiv(N, tm * tl)
    n_pad = n_blocks * tm * tl
    if n_pad != N:
        # Zero rows evaluate to exactly c and are sliced off below.
        X = jnp.pad(X, ((0, n_pad - N), (0, 0)))

    # Lane-dense slab in one relayout pass: (D, R, TL) with R = n_pad // TL.
    xs = X.reshape(n_pad // tl, tl, D).transpose(2, 0, 1)

    out = pl.pallas_call(
        _make_kernel(D),
        out_shape=jax.ShapeDtypeStruct((n_pad // tl, tl), jnp.float32),
        grid=(n_blocks,),
        in_specs=[
            pl.BlockSpec(memory_space=pltpu.MemorySpace.SMEM),   # coefficients + c
            pl.BlockSpec((D, tm, tl), lambda i: (0, i, 0)),      # lane-dense input slab
        ],
        out_specs=pl.BlockSpec((tm, tl), lambda i: (i, 0)),
        compiler_params=pltpu.CompilerParams(
            dimension_semantics=("parallel",)),                  # shard batch across TCs (v7x)
    )(coef, xs)
    return out.reshape(n_pad)[:N]


def init_params(key, in_dim=5):
    """Mirror of LogNormGauss.__init__ (deterministic)."""
    (kW,) = jax.random.split(key, 1)
    W = jax.random.normal(kW, (in_dim, in_dim), dtype=jnp.float32)
    # L is constructed but unused in forward; kept only for fidelity with the
    # module (it hard-codes eye(5, 5), so in_dim is effectively 5).
    L = jnp.tril(W) + jnp.tril(jnp.eye(5, 5, dtype=jnp.float32))
    c = jnp.float32(0.01)
    return W, L, c


if __name__ == "__main__":
    in_dim = 5          # forced by tril(eye(5, 5)) in the module's __init__

    key = jax.random.PRNGKey(0)
    k_param, k_x = jax.random.split(key)
    W, L, c = init_params(k_param, in_dim)

    # 1) Exercise the Pallas kernel: the production-like small batch (forced
    #    through the kernel) and a multi-tile case (grid > 1, ragged tail pad).
    for n in (8, 3000):
        kx = jax.random.fold_in(k_x, n)
        X = jax.random.normal(kx, (n, in_dim), dtype=jnp.float32)
        out = jax.block_until_ready(lognorm_gauss(X, W, c, force_pallas=True))
        ref = -0.5 * jnp.einsum("nj,jk,nk->n", X, W, X) + c
        assert out.shape == (n,)
        assert jnp.allclose(out, ref, atol=1e-4, rtol=1e-4), (n, out[:8], ref[:8])

    # 2) Default wrapper path at the production shape (small-N jnp fast path),
    #    checked against the literal PyTorch formula (diag of the full matrix).
    X8 = jax.random.normal(k_x, (8, in_dim), dtype=jnp.float32)
    out8 = jax.block_until_ready(lognorm_gauss(X8, W, c))
    ref8 = jnp.diag(-0.5 * (X8 @ (W @ X8.T)) + c)
    assert jnp.allclose(out8, ref8, atol=1e-5, rtol=1e-5), (out8, ref8)

    print("KERNEL_OK")
</pallas_src>

<mosaic_0001>
module attributes {stable_mosaic.version = 11 : i64} {
  func.func @kernel(%arg0: i32, %arg1: memref<16xf32, #tpu.memory_space<smem>>, %arg2: memref<5x8x128xf32, #tpu.memory_space<vmem>>, %arg3: memref<8x128xf32, #tpu.memory_space<vmem>>) attributes {dimension_semantics = [#tpu.dimension_semantics<parallel>], iteration_bounds = array<i64: 1>, scalar_prefetch = 0 : i64, scratch_operands = 0 : i64, tpu.core_type = #tpu.core_type<tc>, window_params = [{transform_indices = @transform_0, window_bounds = array<i64: 16>}, {transform_indices = @transform_1, window_bounds = array<i64: 5, 8, 128>}, {transform_indices = @transform_2, window_bounds = array<i64: 8, 128>}]} {
    %c0 = arith.constant 0 : index
    %c0_0 = arith.constant 0 : index
    %c0_1 = arith.constant 0 : index
    %0 = vector.load %arg2[%c0, %c0_0, %c0_1] : memref<5x8x128xf32, #tpu.memory_space<vmem>>, vector<1x8x128xf32>
    %1 = vector.shape_cast %0 : vector<1x8x128xf32> to vector<8x128xf32>
    %c1 = arith.constant 1 : index
    %c0_2 = arith.constant 0 : index
    %c0_3 = arith.constant 0 : index
    %2 = vector.load %arg2[%c1, %c0_2, %c0_3] : memref<5x8x128xf32, #tpu.memory_space<vmem>>, vector<1x8x128xf32>
    %3 = vector.shape_cast %2 : vector<1x8x128xf32> to vector<8x128xf32>
    %c2 = arith.constant 2 : index
    %c0_4 = arith.constant 0 : index
    %c0_5 = arith.constant 0 : index
    %4 = vector.load %arg2[%c2, %c0_4, %c0_5] : memref<5x8x128xf32, #tpu.memory_space<vmem>>, vector<1x8x128xf32>
    %5 = vector.shape_cast %4 : vector<1x8x128xf32> to vector<8x128xf32>
    %c3 = arith.constant 3 : index
    %c0_6 = arith.constant 0 : index
    %c0_7 = arith.constant 0 : index
    %6 = vector.load %arg2[%c3, %c0_6, %c0_7] : memref<5x8x128xf32, #tpu.memory_space<vmem>>, vector<1x8x128xf32>
    %7 = vector.shape_cast %6 : vector<1x8x128xf32> to vector<8x128xf32>
    %c4 = arith.constant 4 : index
    %c0_8 = arith.constant 0 : index
    %c0_9 = arith.constant 0 : index
    %8 = vector.load %arg2[%c4, %c0_8, %c0_9] : memref<5x8x128xf32, #tpu.memory_space<vmem>>, vector<1x8x128xf32>
    %9 = vector.shape_cast %8 : vector<1x8x128xf32> to vector<8x128xf32>
    %c0_10 = arith.constant 0 : index
    %10 = memref.load %arg1[%c0_10] : memref<16xf32, #tpu.memory_space<smem>>
    %11 = vector.broadcast %10 : f32 to vector<8x128xf32>
    %12 = arith.mulf %11, %1 : vector<8x128xf32>
    %c1_11 = arith.constant 1 : index
    %13 = memref.load %arg1[%c1_11] : memref<16xf32, #tpu.memory_space<smem>>
    %14 = vector.broadcast %13 : f32 to vector<8x128xf32>
    %15 = arith.mulf %14, %3 : vector<8x128xf32>
    %16 = arith.addf %12, %15 : vector<8x128xf32>
    %c2_12 = arith.constant 2 : index
    %17 = memref.load %arg1[%c2_12] : memref<16xf32, #tpu.memory_space<smem>>
    %18 = vector.broadcast %17 : f32 to vector<8x128xf32>
    %19 = arith.mulf %18, %5 : vector<8x128xf32>
    %20 = arith.addf %16, %19 : vector<8x128xf32>
    %c3_13 = arith.constant 3 : index
    %21 = memref.load %arg1[%c3_13] : memref<16xf32, #tpu.memory_space<smem>>
    %22 = vector.broadcast %21 : f32 to vector<8x128xf32>
    %23 = arith.mulf %22, %7 : vector<8x128xf32>
    %24 = arith.addf %20, %23 : vector<8x128xf32>
    %c4_14 = arith.constant 4 : index
    %25 = memref.load %arg1[%c4_14] : memref<16xf32, #tpu.memory_space<smem>>
    %26 = vector.broadcast %25 : f32 to vector<8x128xf32>
    %27 = arith.mulf %26, %9 : vector<8x128xf32>
    %28 = arith.addf %24, %27 : vector<8x128xf32>
    %29 = arith.mulf %1, %28 : vector<8x128xf32>
    %c5 = arith.constant 5 : index
    %30 = memref.load %arg1[%c5] : memref<16xf32, #tpu.memory_space<smem>>
    %31 = vector.broadcast %30 : f32 to vector<8x128xf32>
    %32 = arith.mulf %31, %3 : vector<8x128xf32>
    %c6 = arith.constant 6 : index
    %33 = memref.load %arg1[%c6] : memref<16xf32, #tpu.memory_space<smem>>
    %34 = vector.broadcast %33 : f32 to vector<8x128xf32>
    %35 = arith.mulf %34, %5 : vector<8x128xf32>
    %36 = arith.addf %32, %35 : vector<8x128xf32>
    %c7 = arith.constant 7 : index
    %37 = memref.load %arg1[%c7] : memref<16xf32, #tpu.memory_space<smem>>
    %38 = vector.broadcast %37 : f32 to vector<8x128xf32>
    %39 = arith.mulf %38, %7 : vector<8x128xf32>
    %40 = arith.addf %36, %39 : vector<8x128xf32>
    %c8 = arith.constant 8 : index
    %41 = memref.load %arg1[%c8] : memref<16xf32, #tpu.memory_space<smem>>
    %42 = vector.broadcast %41 : f32 to vector<8x128xf32>
    %43 = arith.mulf %42, %9 : vector<8x128xf32>
    %44 = arith.addf %40, %43 : vector<8x128xf32>
    %45 = arith.mulf %3, %44 : vector<8x128xf32>
    %46 = arith.addf %29, %45 : vector<8x128xf32>
    %c9 = arith.constant 9 : index
    %47 = memref.load %arg1[%c9] : memref<16xf32, #tpu.memory_space<smem>>
    %48 = vector.broadcast %47 : f32 to vector<8x128xf32>
    %49 = arith.mulf %48, %5 : vector<8x128xf32>
    %c10 = arith.constant 10 : index
    %50 = memref.load %arg1[%c10] : memref<16xf32, #tpu.memory_space<smem>>
    %51 = vector.broadcast %50 : f32 to vector<8x128xf32>
    %52 = arith.mulf %51, %7 : vector<8x128xf32>
    %53 = arith.addf %49, %52 : vector<8x128xf32>
    %c11 = arith.constant 11 : index
    %54 = memref.load %arg1[%c11] : memref<16xf32, #tpu.memory_space<smem>>
    %55 = vector.broadcast %54 : f32 to vector<8x128xf32>
    %56 = arith.mulf %55, %9 : vector<8x128xf32>
    %57 = arith.addf %53, %56 : vector<8x128xf32>
    %58 = arith.mulf %5, %57 : vector<8x128xf32>
    %59 = arith.addf %46, %58 : vector<8x128xf32>
    %c12 = arith.constant 12 : index
    %60 = memref.load %arg1[%c12] : memref<16xf32, #tpu.memory_space<smem>>
    %61 = vector.broadcast %60 : f32 to vector<8x128xf32>
    %62 = arith.mulf %61, %7 : vector<8x128xf32>
    %c13 = arith.constant 13 : index
    %63 = memref.load %arg1[%c13] : memref<16xf32, #tpu.memory_space<smem>>
    %64 = vector.broadcast %63 : f32 to vector<8x128xf32>
    %65 = arith.mulf %64, %9 : vector<8x128xf32>
    %66 = arith.addf %62, %65 : vector<8x128xf32>
    %67 = arith.mulf %7, %66 : vector<8x128xf32>
    %68 = arith.addf %59, %67 : vector<8x128xf32>
    %c14 = arith.constant 14 : index
    %69 = memref.load %arg1[%c14] : memref<16xf32, #tpu.memory_space<smem>>
    %70 = vector.broadcast %69 : f32 to vector<8x128xf32>
    %71 = arith.mulf %70, %9 : vector<8x128xf32>
    %72 = arith.mulf %9, %71 : vector<8x128xf32>
    %73 = arith.addf %68, %72 : vector<8x128xf32>
    %c15 = arith.constant 15 : index
    %74 = memref.load %arg1[%c15] : memref<16xf32, #tpu.memory_space<smem>>
    %75 = vector.broadcast %74 : f32 to vector<8x128xf32>
    %76 = arith.addf %73, %75 : vector<8x128xf32>
    %c0_15 = arith.constant 0 : index
    %c0_16 = arith.constant 0 : index
    %77 = vector.load %arg3[%c0_15, %c0_16] : memref<8x128xf32, #tpu.memory_space<vmem>>, vector<8x128xf32>
    tpu.vector_store %arg3[%c0_15, %c0_16], %76 {strides = array<i32>} : memref<8x128xf32, #tpu.memory_space<vmem>>, vector<8x128xf32>,
    return
  }
  func.func @transform_0(%arg0: i32) -> i32 {
    %c0_i32 = arith.constant 0 : i32
    %c0_i32_0 = arith.constant 0 : i32
    return %c0_i32 : i32
  }
  func.func @transform_1(%arg0: i32) -> (i32, i32, i32) {
    %c0_i32 = arith.constant 0 : i32
    %c0_i32_0 = arith.constant 0 : i32
    %c0_i32_1 = arith.constant 0 : i32
    return %c0_i32, %arg0, %c0_i32_0 : i32, i32, i32
  }
  func.func @transform_2(%arg0: i32) -> (i32, i32) {
    %c0_i32 = arith.constant 0 : i32
    %c0_i32_0 = arith.constant 0 : i32
    return %arg0, %c0_i32 : i32, i32
  }
}

</mosaic_0001>

<llo_original>
// kernel: tpu_custom_call.1
$region0: #{tpu_custom_call.1}
  #allocation0 [shape = 'u32[]', space=smem, size = 0x4, offset = 0x4, fixed_abs, tag = 'smem constant byte address 0x4 - core index']
  #allocation1 [shape = 'u32[144,128]{1,0:T(1,128)}', space=vmem, size = 0x12000, scoped, tag = 'internal scratch']
  %s0 = inlined_call_operand.hbm [shape: f32[16], index: 0, kind: input, shape index: {}]
  %s1 = inlined_call_operand.hbm [shape: f32[5,8,128], index: 1, kind: input, shape index: {}]
  %s2 = inlined_call_operand.hbm [shape: f32[8,128], index: 2, kind: output, shape index: {}]
  %s3 = sld [smem:[#allocation0]]
  $region26: #{tpu_custom_call.1} parent=0
    _
  %s5 = ssub.s32 1, %s3
  %s6 = scalar_select 0, %s5, %s3
  $region1: #{tpu_custom_call.1} parent=0
    #allocation2 [shape = 'u8[512]{0}', space=smem, size = 0x200, scoped, tag = 'input window, operand 0, single buffered']
    #allocation3 [shape = 's32[1]{0}', space=sflag, size = 0x4, scoped, tag = 'scoped memory for tpu_custom_call.1']
    #allocation4 [shape = 's32[1]{0}', space=sflag, size = 0x4, scoped, tag = 'scoped memory for tpu_custom_call.1']
    #allocation5 [shape = 's32[1]{0}', space=sflag, size = 0x4, scoped, tag = 'scoped memory for tpu_custom_call.1']
    #allocation6 [shape = 'u8[20480]{0}', space=vmem, size = 0x5000, scoped, tag = 'input window, operand 1, single buffered']
    #allocation7 [shape = 'u8[4096]{0}', space=vmem, size = 0x1000, scoped, tag = 'output window, operand 0, single buffered']
    %7 = vsyncpa [#allocation5], 0
    %8 = vsyncpa [#allocation3], 0
    %9 = vsyncpa [#allocation4], 0
    // Predicated region
    $region2: #{tpu_custom_call.1} parent=1 // pred_check
      _
    $region3: #{tpu_custom_call.1} parent=1 // pred_check_branch
      %11 = sbr.rel (0) target = $region5
    $region4: #{tpu_custom_call.1} parent=1 // pred_region
      %s13 = ssub.s32 16, 16
      %14 = vsyncadd [#allocation5], %s13
      %17 = dma.hbm_to_smem %s0, 16, [#allocation2], [#allocation5]
    $region5: #{tpu_custom_call.1} parent=1 // pred_fallthru
      _
    // Predicated region
    $region6: #{tpu_custom_call.1} parent=1 // pred_check
      _
    $region7: #{tpu_custom_call.1} parent=1 // pred_check_branch
      %19 = sbr.rel (0) target = $region9
    $region8: #{tpu_custom_call.1} parent=1 // pred_region
      %s21 = ssub.s32 640, 640
      %22 = vsyncadd [#allocation3], %s21
      %s23 = sshll.u32 [#allocation6], 4
      %s24 = int_to_ptr.vmem [resolvable:$true] %s23
      %29 = dma.hbm_to_vmem [thread:$0]  %s1, 640, %s24, [#allocation3], 128, 128, 8
    $region9: #{tpu_custom_call.1} parent=1 // pred_fallthru
      _
    // Predicated region
    $region10: #{tpu_custom_call.1} parent=1 // pred_check
      _
    $region11: #{tpu_custom_call.1} parent=1 // pred_check_branch
      %31 = sbr.rel (0) target = $region13
    $region12: #{tpu_custom_call.1} parent=1 // pred_region
      %32 = dma.done [#allocation5], 16
    $region13: #{tpu_custom_call.1} parent=1 // pred_fallthru
      _
    // Predicated region
    $region14: #{tpu_custom_call.1} parent=1 // pred_check
      _
    $region15: #{tpu_custom_call.1} parent=1 // pred_check_branch
      %34 = sbr.rel (0) target = $region17
    $region16: #{tpu_custom_call.1} parent=1 // pred_region
      %35 = dma.done [#allocation3], 640
    $region17: #{tpu_custom_call.1} parent=1 // pred_fallthru
      _
    %36 = sfence
    %v37 = vld [vmem:[#allocation6] sm:$0xff]
    %s38 = scalar_lea.vmem [#allocation6], 8
    %v39 = vld [vmem:[%s38] sm:$0xff]
    %s40 = scalar_lea.vmem [#allocation6], 16
    %v41 = vld [vmem:[%s40] sm:$0xff]
    %s42 = scalar_lea.vmem [#allocation6], 24
    %v43 = vld [vmem:[%s42] sm:$0xff]
    %s44 = scalar_lea.vmem [#allocation6], 32
    %v45 = vld [vmem:[%s44] sm:$0xff]
    %s46 = sld [smem:[#allocation2]]
    %v47 = vstv %s46
    %v48 = vmul.f32 %v47, %v37
    %s49 = sld [smem:[#allocation2 + $0x1]]
    %v50 = vstv %s49
    %v51 = vmul.f32 %v50, %v39
    %v52 = vadd.f32 %v48, %v51
    %s53 = sld [smem:[#allocation2 + $0x2]]
    %v54 = vstv %s53
    %v55 = vmul.f32 %v54, %v41
    %v56 = vadd.f32 %v52, %v55
    %s57 = sld [smem:[#allocation2 + $0x3]]
    %v58 = vstv %s57
    %v59 = vmul.f32 %v58, %v43
    %v60 = vadd.f32 %v56, %v59
    %s61 = sld [smem:[#allocation2 + $0x4]]
    %v62 = vstv %s61
    %v63 = vmul.f32 %v62, %v45
    %v64 = vadd.f32 %v60, %v63
    %v65 = vmul.f32 %v37, %v64
    %s66 = sld [smem:[#allocation2 + $0x5]]
    %v67 = vstv %s66
    %v68 = vmul.f32 %v67, %v39
    %s69 = sld [smem:[#allocation2 + $0x6]]
    %v70 = vstv %s69
    %v71 = vmul.f32 %v70, %v41
    %v72 = vadd.f32 %v68, %v71
    %s73 = sld [smem:[#allocation2 + $0x7]]
    %v74 = vstv %s73
    %v75 = vmul.f32 %v74, %v43
    %v76 = vadd.f32 %v72, %v75
    %s77 = sld [smem:[#allocation2 + $0x8]]
    %v78 = vstv %s77
    %v79 = vmul.f32 %v78, %v45
    %v80 = vadd.f32 %v76, %v79
    %v81 = vmul.f32 %v39, %v80
    %v82 = vadd.f32 %v65, %v81
    %s83 = sld [smem:[#allocation2 + $0x9]]
    %v84 = vstv %s83
    %v85 = vmul.f32 %v84, %v41
    %s86 = sld [smem:[#allocation2 + $0xa]]
    %v87 = vstv %s86
    %v88 = vmul.f32 %v87, %v43
    %v89 = vadd.f32 %v85, %v88
    %s90 = sld [smem:[#allocation2 + $0xb]]
    %v91 = vstv %s90
    %v92 = vmul.f32 %v91, %v45
    %v93 = vadd.f32 %v89, %v92
    %v94 = vmul.f32 %v41, %v93
    %v95 = vadd.f32 %v82, %v94
    %s96 = sld [smem:[#allocation2 + $0xc]]
    %v97 = vstv %s96
    %v98 = vmul.f32 %v97, %v43
    %s99 = sld [smem:[#allocation2 + $0xd]]
    %v100 = vstv %s99
    %v101 = vmul.f32 %v100, %v45
    %v102 = vadd.f32 %v98, %v101
    %v103 = vmul.f32 %v43, %v102
    %v104 = vadd.f32 %v95, %v103
    %s105 = sld [smem:[#allocation2 + $0xe]]
    %v106 = vstv %s105
    %v107 = vmul.f32 %v106, %v45
    %v108 = vmul.f32 %v45, %v107
    %v109 = vadd.f32 %v104, %v108
    %s110 = sld [smem:[#allocation2 + $0xf]]
    %v111 = vstv %s110
    %v112 = vadd.f32 %v109, %v111
    %113 = vst [vmem:[#allocation7] sm:$0xff] %v112
    // Predicated region
    $region18: #{tpu_custom_call.1} parent=1 // pred_check
      _
    $region19: #{tpu_custom_call.1} parent=1 // pred_check_branch
      %115 = sbr.rel (0) target = $region21
    $region20: #{tpu_custom_call.1} parent=1 // pred_region
      %s117 = ssub.s32 128, 128
      %118 = vsyncadd [#allocation4], %s117
      %s120 = sshll.u32 [#allocation7], 4
      %s121 = int_to_ptr.vmem [resolvable:$true] %s120
      %123 = dma.vmem_to_hbm [thread:$0]  %s121, 128, %s2, [#allocation4]
    $region21: #{tpu_custom_call.1} parent=1 // pred_fallthru
      _
    // Predicated region
    $region22: #{tpu_custom_call.1} parent=1 // pred_check
      _
    $region23: #{tpu_custom_call.1} parent=1 // pred_check_branch
      %125 = sbr.rel (0) target = $region25
    $region24: #{tpu_custom_call.1} parent=1 // pred_region
      %126 = dma.done [#allocation4], 128
    $region25: #{tpu_custom_call.1} parent=1 // pred_fallthru
      _
    %127 = vsyncpa [#allocation3], 1
    %128 = vsyncpa [#allocation4], 1
    %129 = vsyncpa [#allocation5], 1

</llo_original>
